<compile_context>
chip_gen: v7x
topology: tpu7x:2x2x1
jax: 0.10.0
libtpu: 0.0.40
codegen_flags: <defaults>
</compile_context>

<pallas_src>
import functools

import jax
import jax.numpy as jnp
from jax.experimental import pallas as pl
from jax.experimental.pallas import tpu as pltpu

_OUT_LANES = 128  # lane-dense output width (alpha in col 0, beta in col 1)


def _round_up(n, m):
    return ((n + m - 1) // m) * m


def _softplus(z):
    # Matches torch.nn.functional.softplus (beta=1, threshold=20).
    return jnp.where(z > 20.0, z, jnp.log1p(jnp.exp(jnp.minimum(z, 20.0))))


def _beta_cls_kernel(x_ref, w1_ref, b1_ref, wab_ref, bab_ref, *rest,
                     use_dropout):
    if use_dropout:
        mask_ref, out_ref = rest
    else:
        (out_ref,) = rest

    # fc1 + relu  (MXU matmul, f32 accumulate)
    h = jnp.dot(x_ref[...], w1_ref[...], preferred_element_type=jnp.float32)
    h = jnp.maximum(h + b1_ref[...], 0.0)                      # [tile_b, H]

    # inverted dropout (mask already contains the 1/(1-p) scale)
    if use_dropout:
        h = h * mask_ref[...]

    # fused alpha|beta head: one [H, 128] matmul, one softplus, one lane-dense
    # store (cols 0/1 carry alpha/beta; the rest is padding, sliced off later).
    z = jnp.dot(h, wab_ref[...], preferred_element_type=jnp.float32)
    z = z + bab_ref[...]
    out_ref[...] = _softplus(z) + 1e-09


def beta_distribution_classifier(x, params, *, key=None, dropout_rate=0.1,
                                 training=True):
    """x: [batch, input_dim] f32 -> (alpha [batch,1], beta [batch,1])."""
    w1, b1, wa, ba, wb, bb = params
    batch, input_dim = x.shape
    hidden = w1.shape[1]

    # Fuse the two N=1 heads into one lane-dense [hidden, 128] weight slab.
    wab = (jnp.zeros((hidden, _OUT_LANES), jnp.float32)
           .at[:, 0:1].set(wa).at[:, 1:2].set(wb))
    bab = (jnp.zeros((1, _OUT_LANES), jnp.float32)
           .at[:, 0:1].set(ba).at[:, 1:2].set(bb))

    # Batch tiling: big tiles for pipelining, sublane-aligned, pad the batch.
    tile_b = min(512, _round_up(batch, 8))
    padded_batch = _round_up(batch, tile_b)
    if padded_batch != batch:
        x = jnp.pad(x, ((0, padded_batch - batch), (0, 0)))

    use_dropout = bool(training) and float(dropout_rate) > 0.0

    inputs = [x, w1, b1, wab, bab]
    in_specs = [
        pl.BlockSpec((tile_b, input_dim), lambda i: (i, 0)),   # x (pipelined)
        pl.BlockSpec((input_dim, hidden), lambda i: (0, 0)),   # w1 (resident)
        pl.BlockSpec((1, hidden), lambda i: (0, 0)),           # b1 (resident)
        pl.BlockSpec((hidden, _OUT_LANES), lambda i: (0, 0)),  # wab (resident)
        pl.BlockSpec((1, _OUT_LANES), lambda i: (0, 0)),       # bab (resident)
    ]

    if use_dropout:
        if key is None:
            key = jax.random.PRNGKey(0)
        keep = jax.random.bernoulli(key, 1.0 - float(dropout_rate),
                                    (padded_batch, hidden))
        mask = keep.astype(jnp.float32) * (1.0 / (1.0 - float(dropout_rate)))
        inputs.append(mask)
        in_specs.append(pl.BlockSpec((tile_b, hidden), lambda i: (i, 0)))

    grid = (padded_batch // tile_b,)
    kernel = functools.partial(_beta_cls_kernel, use_dropout=use_dropout)

    flops = (2 * padded_batch * input_dim * hidden
             + 2 * padded_batch * hidden * _OUT_LANES)
    bytes_accessed = 4 * (padded_batch * input_dim
                          + input_dim * hidden + hidden
                          + hidden * _OUT_LANES + _OUT_LANES
                          + padded_batch * _OUT_LANES
                          + (padded_batch * hidden if use_dropout else 0))

    out = pl.pallas_call(
        kernel,
        out_shape=jax.ShapeDtypeStruct((padded_batch, _OUT_LANES), jnp.float32),
        grid_spec=pltpu.PrefetchScalarGridSpec(
            num_scalar_prefetch=0,
            grid=grid,
            in_specs=in_specs,
            out_specs=pl.BlockSpec((tile_b, _OUT_LANES), lambda i: (i, 0)),
        ),
        compiler_params=pltpu.CompilerParams(
            dimension_semantics=("parallel",)),
        cost_estimate=pl.CostEstimate(
            flops=flops,
            transcendentals=padded_batch * _OUT_LANES,
            bytes_accessed=bytes_accessed),
    )(*inputs)

    alpha = out[:batch, 0:1]
    beta = out[:batch, 1:2]
    return alpha, beta


def beta_distribution_classifier_mc(x, params, *, num_samples, key,
                                    dropout_rate=0.1):
    """Monte-Carlo dropout: all samples folded into ONE kernel launch.

    Returns (alpha [S, batch, 1], beta [S, batch, 1]).
    """
    batch = x.shape[0]
    x_rep = jnp.tile(x, (num_samples, 1))          # samples stacked on batch
    alpha, beta = beta_distribution_classifier(
        x_rep, params, key=key, dropout_rate=dropout_rate, training=True)
    return (alpha.reshape(num_samples, batch, 1),
            beta.reshape(num_samples, batch, 1))


def init_params(key, input_dim, hidden_dim):
    """Deterministic synthetic parameters (weights stored as [in, out])."""
    k1, k2, k3, k4, k5, k6 = jax.random.split(key, 6)
    s1 = 1.0 / jnp.sqrt(input_dim)
    s2 = 1.0 / jnp.sqrt(hidden_dim)
    w1 = jax.random.uniform(k1, (input_dim, hidden_dim), jnp.float32, -s1, s1)
    b1 = jax.random.uniform(k2, (1, hidden_dim), jnp.float32, -s1, s1)
    wa = jax.random.uniform(k3, (hidden_dim, 1), jnp.float32, -s2, s2)
    ba = jax.random.uniform(k4, (1, 1), jnp.float32, -s2, s2)
    wb = jax.random.uniform(k5, (hidden_dim, 1), jnp.float32, -s2, s2)
    bb = jax.random.uniform(k6, (1, 1), jnp.float32, -s2, s2)
    return (w1, b1, wa, ba, wb, bb)


def _reference_eval(x, params):
    """Pure-JAX reference, dropout disabled (eval mode)."""
    w1, b1, wa, ba, wb, bb = params
    h = jnp.maximum(x @ w1 + b1, 0.0)
    alpha = jax.nn.softplus(h @ wa + ba) + 1e-09
    beta = jax.nn.softplus(h @ wb + bb) + 1e-09
    return alpha, beta


if __name__ == "__main__":
    key = jax.random.PRNGKey(0)
    kx, kp, kd = jax.random.split(key, 3)

    batch, input_dim, hidden_dim = 8, 32, 32
    x = jax.random.normal(kx, (batch, input_dim), dtype=jnp.float32)
    params = init_params(kp, input_dim, hidden_dim)

    # Correctness vs pure-JAX reference, dropout off (eval mode).
    a_ref, b_ref = _reference_eval(x, params)
    a_ev, b_ev = beta_distribution_classifier(x, params, training=False)
    a_ev = jax.block_until_ready(a_ev)
    b_ev = jax.block_until_ready(b_ev)
    assert a_ev.shape == (batch, 1) and b_ev.shape == (batch, 1)
    assert jnp.allclose(a_ev, a_ref, rtol=1e-5, atol=1e-5)
    assert jnp.allclose(b_ev, b_ref, rtol=1e-5, atol=1e-5)

    # MC-dropout: 4 stochastic forward passes in a single kernel launch.
    a_mc, b_mc = beta_distribution_classifier_mc(
        x, params, num_samples=4, key=kd, dropout_rate=0.1)
    a_mc = jax.block_until_ready(a_mc)
    b_mc = jax.block_until_ready(b_mc)
    assert a_mc.shape == (4, batch, 1) and b_mc.shape == (4, batch, 1)
    assert bool(jnp.all(jnp.isfinite(a_mc))) and bool(jnp.all(a_mc > 0))
    assert bool(jnp.all(jnp.isfinite(b_mc))) and bool(jnp.all(b_mc > 0))

    print("KERNEL_OK")
</pallas_src>

<mosaic_0001>
module attributes {stable_mosaic.version = 11 : i64} {
  func.func @_beta_cls_kernel(%arg0: i32, %arg1: memref<8x32xf32, #tpu.memory_space<vmem>>, %arg2: memref<32x32xf32, #tpu.memory_space<vmem>>, %arg3: memref<1x32xf32, #tpu.memory_space<vmem>>, %arg4: memref<32x128xf32, #tpu.memory_space<vmem>>, %arg5: memref<1x128xf32, #tpu.memory_space<vmem>>, %arg6: memref<8x128xf32, #tpu.memory_space<vmem>>) attributes {dimension_semantics = [#tpu.dimension_semantics<parallel>], iteration_bounds = array<i64: 1>, scalar_prefetch = 0 : i64, scratch_operands = 0 : i64, tpu.core_type = #tpu.core_type<tc>, window_params = [{transform_indices = @transform_0, window_bounds = array<i64: 8, 32>}, {pipeline_mode = #tpu.pipeline_mode<synchronous>, transform_indices = @transform_1, window_bounds = array<i64: 32, 32>}, {pipeline_mode = #tpu.pipeline_mode<synchronous>, transform_indices = @transform_2, window_bounds = array<i64: 1, 32>}, {pipeline_mode = #tpu.pipeline_mode<synchronous>, transform_indices = @transform_3, window_bounds = array<i64: 32, 128>}, {pipeline_mode = #tpu.pipeline_mode<synchronous>, transform_indices = @transform_4, window_bounds = array<i64: 1, 128>}, {transform_indices = @transform_5, window_bounds = array<i64: 8, 128>}]} {
    %c0 = arith.constant 0 : index
    %c0_0 = arith.constant 0 : index
    %0 = vector.load %arg1[%c0, %c0_0] : memref<8x32xf32, #tpu.memory_space<vmem>>, vector<8x32xf32>
    %c0_1 = arith.constant 0 : index
    %c0_2 = arith.constant 0 : index
    %1 = vector.load %arg2[%c0_1, %c0_2] : memref<32x32xf32, #tpu.memory_space<vmem>>, vector<32x32xf32>
    %cst = arith.constant dense<0.000000e+00> : vector<8x32xf32>
    %2 = tpu.matmul %0, %1, %cst {dimension_numbers = #tpu.dot_dimension_numbers<[1], [0], [0], [1], [0, 0, 1, 1], [], []>} : vector<8x32xf32>, vector<32x32xf32>, vector<8x32xf32> -> vector<8x32xf32>
    %c0_3 = arith.constant 0 : index
    %c0_4 = arith.constant 0 : index
    %3 = vector.load %arg3[%c0_3, %c0_4] : memref<1x32xf32, #tpu.memory_space<vmem>>, vector<1x32xf32>
    %4 = vector.broadcast %3 : vector<1x32xf32> to vector<8x32xf32>
    %5 = arith.addf %2, %4 : vector<8x32xf32>
    %cst_5 = arith.constant 0.000000e+00 : f32
    %6 = vector.broadcast %cst_5 : f32 to vector<8x32xf32>
    %7 = arith.maximumf %5, %6 : vector<8x32xf32>
    %c0_6 = arith.constant 0 : index
    %c0_7 = arith.constant 0 : index
    %8 = vector.load %arg4[%c0_6, %c0_7] : memref<32x128xf32, #tpu.memory_space<vmem>>, vector<32x128xf32>
    %cst_8 = arith.constant dense<0.000000e+00> : vector<8x128xf32>
    %9 = tpu.matmul %7, %8, %cst_8 {dimension_numbers = #tpu.dot_dimension_numbers<[1], [0], [0], [1], [0, 0, 1, 1], [], []>} : vector<8x32xf32>, vector<32x128xf32>, vector<8x128xf32> -> vector<8x128xf32>
    %c0_9 = arith.constant 0 : index
    %c0_10 = arith.constant 0 : index
    %10 = vector.load %arg5[%c0_9, %c0_10] : memref<1x128xf32, #tpu.memory_space<vmem>>, vector<1x128xf32>
    %11 = vector.broadcast %10 : vector<1x128xf32> to vector<8x128xf32>
    %12 = arith.addf %9, %11 : vector<8x128xf32>
    %cst_11 = arith.constant 2.000000e+01 : f32
    %13 = vector.broadcast %cst_11 : f32 to vector<8x128xf32>
    %14 = arith.cmpf ogt, %12, %13 : vector<8x128xf32>
    %cst_12 = arith.constant 2.000000e+01 : f32
    %15 = vector.broadcast %cst_12 : f32 to vector<8x128xf32>
    %16 = arith.minimumf %12, %15 : vector<8x128xf32>
    %17 = math.exp %16 : vector<8x128xf32>
    %18 = math.log1p %17 : vector<8x128xf32>
    %19 = arith.select %14, %12, %18 : vector<8x128xi1>, vector<8x128xf32>
    %cst_13 = arith.constant 9.99999971E-10 : f32
    %20 = vector.broadcast %cst_13 : f32 to vector<8x128xf32>
    %21 = arith.addf %19, %20 : vector<8x128xf32>
    %c0_14 = arith.constant 0 : index
    %c0_15 = arith.constant 0 : index
    %22 = vector.load %arg6[%c0_14, %c0_15] : memref<8x128xf32, #tpu.memory_space<vmem>>, vector<8x128xf32>
    tpu.vector_store %arg6[%c0_14, %c0_15], %21 {strides = array<i32>} : memref<8x128xf32, #tpu.memory_space<vmem>>, vector<8x128xf32>,
    return
  }
  func.func @transform_0(%arg0: i32) -> (i32, i32) {
    %c0_i32 = arith.constant 0 : i32
    %c0_i32_0 = arith.constant 0 : i32
    return %arg0, %c0_i32 : i32, i32
  }
  func.func @transform_1(%arg0: i32) -> (i32, i32) {
    %c0_i32 = arith.constant 0 : i32
    %c0_i32_0 = arith.constant 0 : i32
    %c0_i32_1 = arith.constant 0 : i32
    return %c0_i32, %c0_i32_0 : i32, i32
  }
  func.func @transform_2(%arg0: i32) -> (i32, i32) {
    %c0_i32 = arith.constant 0 : i32
    %c0_i32_0 = arith.constant 0 : i32
    %c0_i32_1 = arith.constant 0 : i32
    return %c0_i32, %c0_i32_0 : i32, i32
  }
  func.func @transform_3(%arg0: i32) -> (i32, i32) {
    %c0_i32 = arith.constant 0 : i32
    %c0_i32_0 = arith.constant 0 : i32
    %c0_i32_1 = arith.constant 0 : i32
    return %c0_i32, %c0_i32_0 : i32, i32
  }
  func.func @transform_4(%arg0: i32) -> (i32, i32) {
    %c0_i32 = arith.constant 0 : i32
    %c0_i32_0 = arith.constant 0 : i32
    %c0_i32_1 = arith.constant 0 : i32
    return %c0_i32, %c0_i32_0 : i32, i32
  }
  func.func @transform_5(%arg0: i32) -> (i32, i32) {
    %c0_i32 = arith.constant 0 : i32
    %c0_i32_0 = arith.constant 0 : i32
    return %arg0, %c0_i32 : i32, i32
  }
}

</mosaic_0001>

<llo_original>
// kernel: tpu_custom_call.1
$region0: #{tpu_custom_call.1}
  #allocation0 [shape = 'u32[]', space=smem, size = 0x4, offset = 0x4, fixed_abs, tag = 'smem constant byte address 0x4 - core index']
  #allocation1 [shape = 'u32[144,128]{1,0:T(1,128)}', space=vmem, size = 0x12000, scoped, tag = 'internal scratch']
  %s0 = inlined_call_operand.hbm [shape: f32[8,32], index: 0, kind: input, shape index: {}]
  %s1 = inlined_call_operand.hbm [shape: f32[32,32], index: 1, kind: input, shape index: {}]
  %s2 = inlined_call_operand.vmem [shape: f32[1,32], index: 2, kind: input, shape index: {}]
  %s3 = inlined_call_operand.hbm [shape: f32[32,128], index: 3, kind: input, shape index: {}]
  %s4 = inlined_call_operand.vmem [shape: f32[1,128], index: 4, kind: input, shape index: {}]
  %s5 = inlined_call_operand.hbm [shape: f32[8,128], index: 5, kind: output, shape index: {}]
  %s6 = sld [smem:[#allocation0]]
  $region42: #{tpu_custom_call.1} parent=0
    _
  %s8 = ssub.s32 1, %s6
  %s9 = scalar_select 0, %s8, %s6
  $region1: #{tpu_custom_call.1} parent=0
    #allocation2 [shape = 'u8[4096]{0}', space=vmem, size = 0x1000, scoped, tag = 'input window, operand 0, single buffered']
    #allocation3 [shape = 's32[1]{0}', space=sflag, size = 0x4, scoped, tag = 'scoped memory for tpu_custom_call.1']
    #allocation4 [shape = 's32[1]{0}', space=sflag, size = 0x4, scoped, tag = 'scoped memory for tpu_custom_call.1']
    #allocation5 [shape = 'u8[16384]{0}', space=vmem, size = 0x4000, scoped, tag = 'input window, operand 1, single buffered']
    #allocation6 [shape = 's32[1]{0}', space=sflag, size = 0x4, scoped, tag = 'scoped memory for tpu_custom_call.1']
    #allocation7 [shape = 'u8[16384]{0}', space=vmem, size = 0x4000, scoped, tag = 'input window, operand 3, single buffered']
    #allocation8 [shape = 'u8[4096]{0}', space=vmem, size = 0x1000, scoped, tag = 'output window, operand 0, single buffered']
    %10 = vsyncpa [#allocation3], 0
    %11 = vsyncpa [#allocation6], 0
    %12 = vsyncpa [#allocation4], 0
    // Predicated region
    $region2: #{tpu_custom_call.1} parent=1 // pred_check
      _
    $region3: #{tpu_custom_call.1} parent=1 // pred_check_branch
      %14 = sbr.rel (0) target = $region5
    $region4: #{tpu_custom_call.1} parent=1 // pred_region
      %s16 = ssub.s32 128, 128
      %17 = vsyncadd [#allocation3], %s16
      %s19 = sshll.u32 [#allocation2], 4
      %s20 = int_to_ptr.vmem [resolvable:$true] %s19
      %22 = dma.hbm_to_vmem [thread:$0]  %s0, 128, %s20, [#allocation3]
    $region5: #{tpu_custom_call.1} parent=1 // pred_fallthru
      _
    // Predicated region
    $region6: #{tpu_custom_call.1} parent=1 // pred_check
      _
    $region7: #{tpu_custom_call.1} parent=1 // pred_check_branch
      %24 = sbr.rel (0) target = $region9
    $region8: #{tpu_custom_call.1} parent=1 // pred_region
      %s26 = ssub.s32 512, 512
      %27 = vsyncadd [#allocation6], %s26
      %s28 = sshll.u32 [#allocation5], 4
      %s29 = int_to_ptr.vmem [resolvable:$true] %s28
      %34 = dma.hbm_to_vmem [thread:$0]  %s1, 512, %s29, [#allocation6], 128, 128, 8
    $region9: #{tpu_custom_call.1} parent=1 // pred_fallthru
      _
    // Predicated region
    $region10: #{tpu_custom_call.1} parent=1 // pred_check
      _
    $region11: #{tpu_custom_call.1} parent=1 // pred_check_branch
      %36 = sbr.rel (0) target = $region13
    $region12: #{tpu_custom_call.1} parent=1 // pred_region
      _
    $region13: #{tpu_custom_call.1} parent=1 // pred_fallthru
      _
    // Predicated region
    $region14: #{tpu_custom_call.1} parent=1 // pred_check
      _
    $region15: #{tpu_custom_call.1} parent=1 // pred_check_branch
      %38 = sbr.rel (0) target = $region17
    $region16: #{tpu_custom_call.1} parent=1 // pred_region
      %s40 = ssub.s32 512, 512
      %41 = vsyncadd [#allocation6], %s40
      %s42 = sshll.u32 [#allocation7], 4
      %s43 = int_to_ptr.vmem [resolvable:$true] %s42
      %48 = dma.hbm_to_vmem [thread:$0]  %s3, 512, %s43, [#allocation6], 128, 128, 8
    $region17: #{tpu_custom_call.1} parent=1 // pred_fallthru
      _
    // Predicated region
    $region18: #{tpu_custom_call.1} parent=1 // pred_check
      _
    $region19: #{tpu_custom_call.1} parent=1 // pred_check_branch
      %50 = sbr.rel (0) target = $region21
    $region20: #{tpu_custom_call.1} parent=1 // pred_region
      _
    $region21: #{tpu_custom_call.1} parent=1 // pred_fallthru
      _
    // Predicated region
    $region22: #{tpu_custom_call.1} parent=1 // pred_check
      _
    $region23: #{tpu_custom_call.1} parent=1 // pred_check_branch
      %52 = sbr.rel (0) target = $region25
    $region24: #{tpu_custom_call.1} parent=1 // pred_region
      %53 = dma.done [#allocation3], 128
    $region25: #{tpu_custom_call.1} parent=1 // pred_fallthru
      _
    // Predicated region
    $region26: #{tpu_custom_call.1} parent=1 // pred_check
      _
    $region27: #{tpu_custom_call.1} parent=1 // pred_check_branch
      %55 = sbr.rel (0) target = $region29
    $region28: #{tpu_custom_call.1} parent=1 // pred_region
      %56 = dma.done [#allocation6], 512
    $region29: #{tpu_custom_call.1} parent=1 // pred_fallthru
      _
    // Predicated region
    $region30: #{tpu_custom_call.1} parent=1 // pred_check
      _
    $region31: #{tpu_custom_call.1} parent=1 // pred_check_branch
      %58 = sbr.rel (0) target = $region33
    $region32: #{tpu_custom_call.1} parent=1 // pred_region
      %59 = dma.done [#allocation6], 512
    $region33: #{tpu_custom_call.1} parent=1 // pred_fallthru
      _
    %v60 = vld [vmem:[#allocation2] sm:$0xff]
    %v61 = vld [vmem:[#allocation5] sm:$0xff]
    %v62 = vld [vmem:[#allocation5 + $0x8] sm:$0xff]
    %v63 = vld [vmem:[#allocation5 + $0x10] sm:$0xff]
    %v64 = vld [vmem:[#allocation5 + $0x18] sm:$0xff]
    %v65 = vld [vmem:[%s2] sm:$0x1]
    %v67 = vlaneseq
    %v68 = vshrl.u32 %v67, 7
    %v69 = vsub.s32 0, %v68
    %v70 = vrot.slane %v65, %v69
    %vm72 = vcmask 261120
    %v74 = vsel %vm72, %v60, 0
    %76 = vmatprep.subr.mxu0 0.0
    %77 = vmatpush1.msra.mxu0 %v61
    %78 = vmatprep.subr.mxu0 0.0
    %79 = vmatpush1.msra.mxu0 %v62
    %80 = vmatprep.subr.mxu0 0.0
    %81 = vmatpush1.msra.mxu0 %v63
    %82 = vmatprep.subr.mxu0 0.0
    %83 = vmatpush1.msra.mxu0 %v64
    %84 = vmatprep.subr.mxu0 0.0
    %85 = vmatpush1.msra.mxu0 0.0
    %86 = vmatprep.subr.mxu0 0.0
    %87 = vmatpush1.msra.mxu0 0.0
    %88 = vmatprep.subr.mxu0 0.0
    %89 = vmatpush1.msra.mxu0 0.0
    %90 = vmatprep.subr.mxu0 0.0
    %91 = vmatpush1.msra.mxu0 0.0
    %92 = vmatprep.subr.mxu0 0.0
    %93 = vmatpush1.msra.mxu0 0.0
    %94 = vmatprep.subr.mxu0 0.0
    %95 = vmatpush1.msra.mxu0 0.0
    %96 = vmatprep.subr.mxu0 0.0
    %97 = vmatpush1.msra.mxu0 0.0
    %98 = vmatprep.subr.mxu0 0.0
    %99 = vmatpush1.msra.mxu0 0.0
    %100 = vmatprep.subr.mxu0 0.0
    %101 = vmatpush1.msra.mxu0 0.0
    %102 = vmatprep.subr.mxu0 0.0
    %103 = vmatpush1.msra.mxu0 0.0
    %104 = vmatprep.subr.mxu0 0.0
    %105 = vmatpush1.msra.mxu0 0.0
    %106 = vmatprep.subr.mxu0 0.0
    %107 = vmatpush1.msra.mxu0 0.0
    %108 = vmatprep.subr.mxu0 0.0
    %109 = vmatpush1.msra.mxu0 0.0
    %110 = vmatprep.subr.mxu0 0.0
    %111 = vmatpush1.msra.mxu0 0.0
    %112 = vmatprep.subr.mxu0 0.0
    %113 = vmatpush1.msra.mxu0 0.0
    %114 = vmatprep.subr.mxu0 0.0
    %115 = vmatpush1.msra.mxu0 0.0
    %116 = vmatprep.subr.mxu0 0.0
    %117 = vmatpush1.msra.mxu0 0.0
    %118 = vmatprep.subr.mxu0 0.0
    %119 = vmatpush1.msra.mxu0 0.0
    %120 = vmatprep.subr.mxu0 0.0
    %121 = vmatpush1.msra.mxu0 0.0
    %122 = vmatprep.subr.mxu0 0.0
    %123 = vmatpush1.msra.mxu0 0.0
    %124 = vmatprep.subr.mxu0 0.0
    %125 = vmatpush1.msra.mxu0 0.0
    %126 = vmatprep.subr.mxu0 0.0
    %127 = vmatpush1.msra.mxu0 0.0
    %128 = vmatprep.subr.mxu0 0.0
    %129 = vmatpush1.msra.mxu0 0.0
    %130 = vmatprep.subr.mxu0 0.0
    %131 = vmatpush1.msra.mxu0 0.0
    %132 = vmatprep.subr.mxu0 0.0
    %133 = vmatpush1.msra.mxu0 0.0
    %134 = vmatprep.subr.mxu0 0.0
    %135 = vmatpush1.msra.mxu0 0.0
    %136 = vmatprep.subr.mxu0 0.0
    %137 = vmatpush1.msra.mxu0 0.0
    %138 = vmatprep.subr.mxu0 0.0
    %139 = vmatpush1.msra.mxu0 0.0
    %140 = vmatprep.mubr.f32.mxu0 0.0
    %141 = vmatmul.mubr.f32.gmra.mrb[0].mxu0 %v74
    %v142 = vpop.f32.mrb[0].mxu0
    %v143 = vadd.f32 %v70, %v142
    %v144 = vpop.f32.mrb[0].mxu0
    %145 = vdwg.mxu0
    %v146 = vmax.f32 %v143, 0.0
    %v147 = vld [vmem:[#allocation7] sm:$0xff]
    %v148 = vld [vmem:[#allocation7 + $0x8] sm:$0xff]
    %v149 = vld [vmem:[#allocation7 + $0x10] sm:$0xff]
    %v150 = vld [vmem:[#allocation7 + $0x18] sm:$0xff]
    %v151 = vld [vmem:[%s4] sm:$0x1]
    %v153 = vlaneseq
    %v154 = vshrl.u32 %v153, 7
    %v155 = vsub.s32 0, %v154
    %v156 = vrot.slane %v151, %v155
    %v159 = vsel %vm72, %v146, 0
    %161 = vmatprep.subr.mxu0 0.0
    %162 = vmatpush1.msra.mxu0 %v147
    %163 = vmatprep.subr.mxu0 0.0
    %164 = vmatpush1.msra.mxu0 %v148
    %165 = vmatprep.subr.mxu0 0.0
    %166 = vmatpush1.msra.mxu0 %v149
    %167 = vmatprep.subr.mxu0 0.0
    %168 = vmatpush1.msra.mxu0 %v150
    %169 = vmatprep.subr.mxu0 0.0
    %170 = vmatpush1.msra.mxu0 0.0
    %171 = vmatprep.subr.mxu0 0.0
    %172 = vmatpush1.msra.mxu0 0.0
    %173 = vmatprep.subr.mxu0 0.0
    %174 = vmatpush1.msra.mxu0 0.0
    %175 = vmatprep.subr.mxu0 0.0
    %176 = vmatpush1.msra.mxu0 0.0
    %177 = vmatprep.subr.mxu0 0.0
    %178 = vmatpush1.msra.mxu0 0.0
    %179 = vmatprep.subr.mxu0 0.0
    %180 = vmatpush1.msra.mxu0 0.0
    %181 = vmatprep.subr.mxu0 0.0
    %182 = vmatpush1.msra.mxu0 0.0
    %183 = vmatprep.subr.mxu0 0.0
    %184 = vmatpush1.msra.mxu0 0.0
    %185 = vmatprep.subr.mxu0 0.0
    %186 = vmatpush1.msra.mxu0 0.0
    %187 = vmatprep.subr.mxu0 0.0
    %188 = vmatpush1.msra.mxu0 0.0
    %189 = vmatprep.subr.mxu0 0.0
    %190 = vmatpush1.msra.mxu0 0.0
    %191 = vmatprep.subr.mxu0 0.0
    %192 = vmatpush1.msra.mxu0 0.0
    %193 = vmatprep.subr.mxu0 0.0
    %194 = vmatpush1.msra.mxu0 0.0
    %195 = vmatprep.subr.mxu0 0.0
    %196 = vmatpush1.msra.mxu0 0.0
    %197 = vmatprep.subr.mxu0 0.0
    %198 = vmatpush1.msra.mxu0 0.0
    %199 = vmatprep.subr.mxu0 0.0
    %200 = vmatpush1.msra.mxu0 0.0
    %201 = vmatprep.subr.mxu0 0.0
    %202 = vmatpush1.msra.mxu0 0.0
    %203 = vmatprep.subr.mxu0 0.0
    %204 = vmatpush1.msra.mxu0 0.0
    %205 = vmatprep.subr.mxu0 0.0
    %206 = vmatpush1.msra.mxu0 0.0
    %207 = vmatprep.subr.mxu0 0.0
    %208 = vmatpush1.msra.mxu0 0.0
    %209 = vmatprep.subr.mxu0 0.0
    %210 = vmatpush1.msra.mxu0 0.0
    %211 = vmatprep.subr.mxu0 0.0
    %212 = vmatpush1.msra.mxu0 0.0
    %213 = vmatprep.subr.mxu0 0.0
    %214 = vmatpush1.msra.mxu0 0.0
    %215 = vmatprep.subr.mxu0 0.0
    %216 = vmatpush1.msra.mxu0 0.0
    %217 = vmatprep.subr.mxu0 0.0
    %218 = vmatpush1.msra.mxu0 0.0
    %219 = vmatprep.subr.mxu0 0.0
    %220 = vmatpush1.msra.mxu0 0.0
    %221 = vmatprep.subr.mxu0 0.0
    %222 = vmatpush1.msra.mxu0 0.0
    %223 = vmatprep.subr.mxu0 0.0
    %224 = vmatpush1.msra.mxu0 0.0
    %225 = vmatprep.mubr.f32.mxu0 0.0
    %226 = vmatmul.mubr.f32.gmra.mrb[0].mxu0 %v159
    %v227 = vpop.f32.mrb[0].mxu0
    %v228 = vadd.f32 %v156, %v227
    %v229 = vpop.f32.mrb[0].mxu0
    %230 = vdwg.mxu0
    %vm231 = vcmp.gt.f32.partialorder %v228, 20.0
    %v232 = vmin.f32 %v228, 20.0
    %v233 = vmul.f32 %v232, 1.442695
    %v234 = vpow.pop %v233
    %v235 = vadd.f32 %v234, 1.0
    %v236 = vlog2.pop %v235
    %v237 = vmul.f32 %v236, 0.6931472
    %v238 = vmul.f32 -0.5, %v234
    %v239 = vadd.f32 %v238, 1.0
    %v240 = vmul.f32 %v239, %v234
    %v241 = vand.u32 2147483647, %v234
    %vm242 = vcmp.lt.f32.partialorder %v241, 0.0004427343
    %v243 = vsel %vm242, %v240, %v237
    %v244 = vsel %vm231, %v228, %v243
    %v245 = vadd.f32 %v244, 1e-09
    %246 = vst [vmem:[#allocation8] sm:$0xff] %v245
    // Predicated region
    $region34: #{tpu_custom_call.1} parent=1 // pred_check
      _
    $region35: #{tpu_custom_call.1} parent=1 // pred_check_branch
      %248 = sbr.rel (0) target = $region37
    $region36: #{tpu_custom_call.1} parent=1 // pred_region
      %s250 = ssub.s32 128, 128
      %251 = vsyncadd [#allocation4], %s250
      %s253 = sshll.u32 [#allocation8], 4
      %s254 = int_to_ptr.vmem [resolvable:$true] %s253
      %256 = dma.vmem_to_hbm [thread:$0]  %s254, 128, %s5, [#allocation4]
    $region37: #{tpu_custom_call.1} parent=1 // pred_fallthru
      _
    // Predicated region
    $region38: #{tpu_custom_call.1} parent=1 // pred_check
      _
    $region39: #{tpu_custom_call.1} parent=1 // pred_check_branch
      %258 = sbr.rel (0) target = $region41
    $region40: #{tpu_custom_call.1} parent=1 // pred_region
      %259 = dma.done [#allocation4], 128
    $region41: #{tpu_custom_call.1} parent=1 // pred_fallthru
      _
    %260 = vsyncpa [#allocation3], 1
    %261 = vsyncpa [#allocation6], 1
    %262 = vsyncpa [#allocation4], 1

</llo_original>
